<compile_context>
chip_gen: v7x
topology: tpu7x:2x2x1
jax: 0.10.0
libtpu: 0.0.40
codegen_flags: <defaults>
</compile_context>

<pallas_src>
import jax
import jax.numpy as jnp
from jax.experimental import pallas as pl
from jax.experimental.pallas import tpu as pltpu

N_STATES = 4       # e.g. CartPole observation dim
N_ACTIONS = 2      # e.g. CartPole action dim
HIDDEN = 50
BATCH = 32         # replay-batch sized call amortizes fixed kernel overhead

_LANES = 128
_HEAD_W0 = 8                   # head weights start at row 8 (fc1 region padded to 8 rows)
_HEAD_B = _HEAD_W0 + _LANES    # 136: head bias row
_W_ROWS = _HEAD_B + 8          # 144 total rows (multiple of 8)


def _dueling_body(x_ref, w_ref, out_ref):
    """Shared body: one dueling-net forward on (x_ref, packed w_ref) -> out_ref."""
    x = x_ref[...]                                   # [B, N_STATES]
    b = x.shape[0]

    # fc1 + ReLU as N_STATES broadcast FMAs on the VPU (an MXU matmul with K=4
    # would be >96% zero padding plus a result-FIFO round trip).
    acts = w_ref[N_STATES:N_STATES + 1, :]           # (1, 128) fc1 bias row
    for k in range(N_STATES):                        # static unroll, K = 4
        acts = acts + x[:, k:k + 1] * w_ref[k:k + 1, :]
    h = jnp.maximum(acts, 0.0)                       # [B, 128]; lanes >= HIDDEN are 0

    # Fused V/A head: one fully aligned [B,128] x [128,128] MXU matmul
    # (zero-padded rows/cols contribute nothing).
    va = (jnp.dot(h, w_ref[_HEAD_W0:_HEAD_W0 + _LANES, :],
                  preferred_element_type=jnp.float32)
          + w_ref[_HEAD_B:_HEAD_B + 1, :])           # cols 0..A-1 = adv, col A = value

    # PyTorch `Advantage.mean()` is a GLOBAL scalar mean over all B*A advantages.
    mean_a = jnp.sum(va[:, :N_ACTIONS]) / (b * N_ACTIONS)
    v = va[:, N_ACTIONS:N_ACTIONS + 1]               # [B, 1]

    # Lane-dense full-tile store; columns >= N_ACTIONS are junk and sliced off
    # in the JAX wrapper.
    out_ref[...] = v + va - mean_a


def _dueling_kernel(x_ref, w_ref, out_ref):
    _dueling_body(x_ref, w_ref, out_ref)


def _dueling_pair_kernel(xe_ref, we_ref, xt_ref, wt_ref, oe_ref, ot_ref):
    # Eval-net and target-net forwards fused into one launch (DQN learn step).
    _dueling_body(xe_ref, we_ref, oe_ref)
    _dueling_body(xt_ref, wt_ref, ot_ref)


def pack_params(w1, b1, wv, bv, wa, ba):
    """One-time layout transform (do at init, NOT per forward call).

    Weights are PyTorch (out, in) convention, biases 1-D.
    Returns a single zero-padded f32 buffer of shape [_W_ROWS, 128].
    """
    buf = jnp.zeros((_W_ROWS, _LANES), jnp.float32)
    buf = buf.at[:N_STATES, :HIDDEN].set(w1.T)                     # fc1 weights
    buf = buf.at[N_STATES, :HIDDEN].set(b1)                        # fc1 bias
    buf = buf.at[_HEAD_W0:_HEAD_W0 + HIDDEN, :N_ACTIONS].set(wa.T)  # advantage head
    buf = buf.at[_HEAD_W0:_HEAD_W0 + HIDDEN, N_ACTIONS].set(wv[0])  # value head
    buf = buf.at[_HEAD_B, :N_ACTIONS].set(ba)                      # head bias [ba|bv]
    buf = buf.at[_HEAD_B, N_ACTIONS].set(bv[0])
    return buf


_VMEM_SPEC = pl.BlockSpec(memory_space=pltpu.MemorySpace.VMEM)


def _cost(n_nets, batch):
    flops = 2 * batch * (N_STATES * HIDDEN + HIDDEN * (N_ACTIONS + 1)) * n_nets
    bytes_accessed = 4 * n_nets * (batch * N_STATES + _W_ROWS * _LANES + batch * _LANES)
    return pl.CostEstimate(flops=flops, transcendentals=0,
                           bytes_accessed=bytes_accessed)


def dueling_net_forward(x, w_packed):
    """x: [B, N_STATES] f32; w_packed from pack_params(). Returns Q: [B, N_ACTIONS]."""
    B = x.shape[0]
    # Single block, no grid: at these shapes a grid (even on v7x megacore) would
    # only add ~0.35 us/step overhead for zero work. Everything fits VMEM trivially
    # on v5e/v6e (128 MiB) and v7x (64 MiB).
    q_pad = pl.pallas_call(
        _dueling_kernel,
        out_shape=jax.ShapeDtypeStruct((B, _LANES), jnp.float32),
        in_specs=[_VMEM_SPEC, _VMEM_SPEC],
        out_specs=_VMEM_SPEC,
        cost_estimate=_cost(1, B),
    )(x, w_packed)
    return q_pad[:, :N_ACTIONS]


def dueling_net_forward_pair(x_eval, w_eval, x_targ, w_targ):
    """Fused eval-net + target-net forward in ONE pallas_call (DQN learn step)."""
    Be, Bt = x_eval.shape[0], x_targ.shape[0]
    qe_pad, qt_pad = pl.pallas_call(
        _dueling_pair_kernel,
        out_shape=(jax.ShapeDtypeStruct((Be, _LANES), jnp.float32),
                   jax.ShapeDtypeStruct((Bt, _LANES), jnp.float32)),
        in_specs=[_VMEM_SPEC] * 4,
        out_specs=(_VMEM_SPEC, _VMEM_SPEC),
        cost_estimate=_cost(2, Be),
    )(x_eval, w_eval, x_targ, w_targ)
    return qe_pad[:, :N_ACTIONS], qt_pad[:, :N_ACTIONS]


forward = jax.jit(dueling_net_forward)
forward_pair = jax.jit(dueling_net_forward_pair)


def _reference(x, w1, b1, wv, bv, wa, ba):
    h = jnp.maximum(x @ w1.T + b1, 0.0)
    v = h @ wv.T + bv
    a = h @ wa.T + ba
    return v + a - jnp.mean(a)


def _make_params(key):
    k1, k2, k3, k4, k5, k6 = jax.random.split(key, 6)
    w1 = 0.1 * jax.random.normal(k1, (HIDDEN, N_STATES), dtype=jnp.float32)
    b1 = 0.1 * jax.random.normal(k2, (HIDDEN,), dtype=jnp.float32)
    wv = 0.1 * jax.random.normal(k3, (1, HIDDEN), dtype=jnp.float32)
    bv = 0.1 * jax.random.normal(k4, (1,), dtype=jnp.float32)
    wa = 0.1 * jax.random.normal(k5, (N_ACTIONS, HIDDEN), dtype=jnp.float32)
    ba = 0.1 * jax.random.normal(k6, (N_ACTIONS,), dtype=jnp.float32)
    return w1, b1, wv, bv, wa, ba


if __name__ == "__main__":
    key = jax.random.PRNGKey(0)
    kx1, kx2, kp1, kp2 = jax.random.split(key, 4)

    x_eval = jax.random.normal(kx1, (BATCH, N_STATES), dtype=jnp.float32)
    x_targ = jax.random.normal(kx2, (BATCH, N_STATES), dtype=jnp.float32)

    params_eval = _make_params(kp1)   # weights ~ N(0, 0.1) (matches .normal_(0, 0.1))
    params_targ = _make_params(kp2)

    # One-time packing (init-time layout; outside the hot loop).
    w_eval = pack_params(*params_eval)
    w_targ = pack_params(*params_targ)

    # Single-net forward.
    out = forward(x_eval, w_eval)
    out = jax.block_until_ready(out)
    ref = _reference(x_eval, *params_eval)
    assert out.shape == (BATCH, N_ACTIONS)
    assert jnp.allclose(out, ref, atol=1e-5, rtol=1e-5)

    # Fused eval + target forward (one launch for the DQN learn step).
    q_e, q_t = forward_pair(x_eval, w_eval, x_targ, w_targ)
    q_e, q_t = jax.block_until_ready((q_e, q_t))
    assert jnp.allclose(q_e, _reference(x_eval, *params_eval), atol=1e-5, rtol=1e-5)
    assert jnp.allclose(q_t, _reference(x_targ, *params_targ), atol=1e-5, rtol=1e-5)

    print("KERNEL_OK")
</pallas_src>

<mosaic_0001>
module attributes {stable_mosaic.version = 11 : i64} {
  func.func @_dueling_kernel(%arg0: memref<32x4xf32, #tpu.memory_space<vmem>>, %arg1: memref<144x128xf32, #tpu.memory_space<vmem>>, %arg2: memref<32x128xf32, #tpu.memory_space<vmem>>) attributes {dimension_semantics = [], scalar_prefetch = 0 : i64, scratch_operands = 0 : i64, tpu.core_type = #tpu.core_type<tc>} {
    %c0 = arith.constant 0 : index
    %c0_0 = arith.constant 0 : index
    %0 = vector.load %arg0[%c0, %c0_0] : memref<32x4xf32, #tpu.memory_space<vmem>>, vector<32x4xf32>
    %c4 = arith.constant 4 : index
    %c0_1 = arith.constant 0 : index
    %1 = vector.load %arg1[%c4, %c0_1] : memref<144x128xf32, #tpu.memory_space<vmem>>, vector<1x128xf32>
    %2 = vector.extract_strided_slice %0 {offsets = [0, 0], sizes = [32, 1], strides = [1, 1]} : vector<32x4xf32> to vector<32x1xf32>
    %c0_2 = arith.constant 0 : index
    %c0_3 = arith.constant 0 : index
    %3 = vector.load %arg1[%c0_2, %c0_3] : memref<144x128xf32, #tpu.memory_space<vmem>>, vector<1x128xf32>
    %4 = vector.broadcast %2 : vector<32x1xf32> to vector<32x128xf32>
    %5 = vector.broadcast %3 : vector<1x128xf32> to vector<32x128xf32>
    %6 = arith.mulf %4, %5 : vector<32x128xf32>
    %7 = vector.broadcast %1 : vector<1x128xf32> to vector<32x128xf32>
    %8 = arith.addf %7, %6 : vector<32x128xf32>
    %9 = vector.extract_strided_slice %0 {offsets = [0, 1], sizes = [32, 1], strides = [1, 1]} : vector<32x4xf32> to vector<32x1xf32>
    %c1 = arith.constant 1 : index
    %c0_4 = arith.constant 0 : index
    %10 = vector.load %arg1[%c1, %c0_4] : memref<144x128xf32, #tpu.memory_space<vmem>>, vector<1x128xf32>
    %11 = vector.broadcast %9 : vector<32x1xf32> to vector<32x128xf32>
    %12 = vector.broadcast %10 : vector<1x128xf32> to vector<32x128xf32>
    %13 = arith.mulf %11, %12 : vector<32x128xf32>
    %14 = arith.addf %8, %13 : vector<32x128xf32>
    %15 = vector.extract_strided_slice %0 {offsets = [0, 2], sizes = [32, 1], strides = [1, 1]} : vector<32x4xf32> to vector<32x1xf32>
    %c2 = arith.constant 2 : index
    %c0_5 = arith.constant 0 : index
    %16 = vector.load %arg1[%c2, %c0_5] : memref<144x128xf32, #tpu.memory_space<vmem>>, vector<1x128xf32>
    %17 = vector.broadcast %15 : vector<32x1xf32> to vector<32x128xf32>
    %18 = vector.broadcast %16 : vector<1x128xf32> to vector<32x128xf32>
    %19 = arith.mulf %17, %18 : vector<32x128xf32>
    %20 = arith.addf %14, %19 : vector<32x128xf32>
    %21 = vector.extract_strided_slice %0 {offsets = [0, 3], sizes = [32, 1], strides = [1, 1]} : vector<32x4xf32> to vector<32x1xf32>
    %c3 = arith.constant 3 : index
    %c0_6 = arith.constant 0 : index
    %22 = vector.load %arg1[%c3, %c0_6] : memref<144x128xf32, #tpu.memory_space<vmem>>, vector<1x128xf32>
    %23 = vector.broadcast %21 : vector<32x1xf32> to vector<32x128xf32>
    %24 = vector.broadcast %22 : vector<1x128xf32> to vector<32x128xf32>
    %25 = arith.mulf %23, %24 : vector<32x128xf32>
    %26 = arith.addf %20, %25 : vector<32x128xf32>
    %cst = arith.constant 0.000000e+00 : f32
    %27 = vector.broadcast %cst : f32 to vector<32x128xf32>
    %28 = arith.maximumf %26, %27 : vector<32x128xf32>
    %c8 = arith.constant 8 : index
    %c0_7 = arith.constant 0 : index
    %29 = vector.load %arg1[%c8, %c0_7] : memref<144x128xf32, #tpu.memory_space<vmem>>, vector<128x128xf32>
    %cst_8 = arith.constant dense<0.000000e+00> : vector<32x128xf32>
    %30 = tpu.matmul %28, %29, %cst_8 {dimension_numbers = #tpu.dot_dimension_numbers<[1], [0], [0], [1], [0, 0, 1, 1], [], []>} : vector<32x128xf32>, vector<128x128xf32>, vector<32x128xf32> -> vector<32x128xf32>
    %c136 = arith.constant 136 : index
    %c0_9 = arith.constant 0 : index
    %31 = vector.load %arg1[%c136, %c0_9] : memref<144x128xf32, #tpu.memory_space<vmem>>, vector<1x128xf32>
    %32 = vector.broadcast %31 : vector<1x128xf32> to vector<32x128xf32>
    %33 = arith.addf %30, %32 : vector<32x128xf32>
    %34 = vector.extract_strided_slice %33 {offsets = [0, 0], sizes = [32, 2], strides = [1, 1]} : vector<32x128xf32> to vector<32x2xf32>
    %35 = vector.shape_cast %34 : vector<32x2xf32> to vector<1x32x2xf32>
    %cst_10 = arith.constant dense<0.000000e+00> : vector<1xf32>
    %36 = vector.multi_reduction <add>, %35, %cst_10 [1, 2] : vector<1x32x2xf32> to vector<1xf32>
    %37 = vector.shape_cast %36 : vector<1xf32> to vector<1x1x1xf32>
    %38 = vector.extract %37[0, 0, 0] : f32 from vector<1x1x1xf32>
    %cst_11 = arith.constant 6.400000e+01 : f32
    %39 = arith.divf %38, %cst_11 : f32
    %40 = vector.extract_strided_slice %33 {offsets = [0, 2], sizes = [32, 1], strides = [1, 1]} : vector<32x128xf32> to vector<32x1xf32>
    %41 = vector.broadcast %40 : vector<32x1xf32> to vector<32x128xf32>
    %42 = arith.addf %41, %33 : vector<32x128xf32>
    %43 = vector.broadcast %39 : f32 to vector<32x128xf32>
    %44 = arith.subf %42, %43 : vector<32x128xf32>
    %c0_12 = arith.constant 0 : index
    %c0_13 = arith.constant 0 : index
    %45 = vector.load %arg2[%c0_12, %c0_13] : memref<32x128xf32, #tpu.memory_space<vmem>>, vector<32x128xf32>
    tpu.vector_store %arg2[%c0_12, %c0_13], %44 {strides = array<i32>} : memref<32x128xf32, #tpu.memory_space<vmem>>, vector<32x128xf32>,
    return
  }
}

</mosaic_0001>

<llo_original>
// kernel: dueling_net_forward.1
$region0: #{dueling_net_forward.1}
  #allocation0 [shape = 'u32[]', space=smem, size = 0x4, offset = 0x4, fixed_abs, tag = 'smem constant byte address 0x4 - core index']
  #allocation1 [shape = 'u32[144,128]{1,0:T(1,128)}', space=vmem, size = 0x12000, scoped, tag = 'internal scratch']
  %s0 = inlined_call_operand.vmem [shape: f32[32,4], index: 0, kind: input, shape index: {}]
  %s1 = inlined_call_operand.hbm [shape: f32[144,128], index: 1, kind: input, shape index: {}]
  %s2 = inlined_call_operand.vmem [shape: f32[32,128], index: 2, kind: output, shape index: {}]
  %s3 = sld [smem:[#allocation0]]
  $region22: #{dueling_net_forward.1} parent=0
    _
  %s5 = ssub.s32 1, %s3
  %s6 = scalar_select 0, %s5, %s3
  $region1: #{dueling_net_forward.1} parent=0
    #allocation2 [shape = 'u8[73728]{0}', space=vmem, size = 0x12000, scoped, tag = 'input window, operand 1, single buffered']
    #allocation3 [shape = 's32[1]{0}', space=sflag, size = 0x4, scoped, tag = 'scoped memory for dueling_net_forward.1']
    %7 = vsyncpa [#allocation3], 0
    // Predicated region
    $region2: #{dueling_net_forward.1} parent=1 // pred_check
      _
    $region3: #{dueling_net_forward.1} parent=1 // pred_check_branch
      %9 = sbr.rel (0) target = $region5
    $region4: #{dueling_net_forward.1} parent=1 // pred_region
      _
    $region5: #{dueling_net_forward.1} parent=1 // pred_fallthru
      _
    // Predicated region
    $region6: #{dueling_net_forward.1} parent=1 // pred_check
      _
    $region7: #{dueling_net_forward.1} parent=1 // pred_check_branch
      %11 = sbr.rel (0) target = $region9
    $region8: #{dueling_net_forward.1} parent=1 // pred_region
      %s13 = ssub.s32 2304, 2304
      %14 = vsyncadd [#allocation3], %s13
      %s15 = sshll.u32 [#allocation2], 4
      %s16 = int_to_ptr.vmem [resolvable:$true] %s15
      %21 = dma.hbm_to_vmem [thread:$0]  %s1, 2304, %s16, [#allocation3], 128, 128, 8
    $region9: #{dueling_net_forward.1} parent=1 // pred_fallthru
      _
    // Predicated region
    $region10: #{dueling_net_forward.1} parent=1 // pred_check
      _
    $region11: #{dueling_net_forward.1} parent=1 // pred_check_branch
      %23 = sbr.rel (0) target = $region13
    $region12: #{dueling_net_forward.1} parent=1 // pred_region
      %24 = dma.done [#allocation3], 2304
    $region13: #{dueling_net_forward.1} parent=1 // pred_fallthru
      _
    %v25 = vld [vmem:[%s0] sm:$0xff]
    %v26 = vld [vmem:[%s0 + $0x8] sm:$0xff]
    %v27 = vld [vmem:[%s0 + $0x10] sm:$0xff]
    %v28 = vld [vmem:[%s0 + $0x18] sm:$0xff]
    %v29 = vld [vmem:[#allocation2 + $0x4] sm:$0x1]
    %v30 = vld [vmem:[#allocation2] sm:$0x1]
    %32 = vset.pattern.permute.xlu0 0
    %33 = vperm.xlu0 %32, %v25
    %v34 = vpop.permute.xlu0 %33
    %37 = vset.pattern.permute.xlu0 0
    %38 = vperm.xlu0 %37, %v26
    %v39 = vpop.permute.xlu0 %38
    %42 = vset.pattern.permute.xlu0 0
    %43 = vperm.xlu0 %42, %v27
    %v44 = vpop.permute.xlu0 %43
    %47 = vset.pattern.permute.xlu0 0
    %48 = vperm.xlu0 %47, %v28
    %v49 = vpop.permute.xlu0 %48
    %v51 = vlaneseq
    %v52 = vshrl.u32 %v51, 7
    %v53 = vsub.s32 0, %v52
    %v54 = vrot.slane %v30, %v53
    %v55 = vmul.f32 %v34, %v54
    %v56 = vmul.f32 %v39, %v54
    %v57 = vmul.f32 %v44, %v54
    %v58 = vmul.f32 %v49, %v54
    %v59 = vlaneseq
    %v60 = vshrl.u32 %v59, 7
    %v61 = vsub.s32 0, %v60
    %v62 = vrot.slane %v29, %v61
    %v63 = vadd.f32 %v62, %v55
    %v64 = vadd.f32 %v62, %v56
    %v65 = vadd.f32 %v62, %v57
    %v66 = vadd.f32 %v62, %v58
    %v67 = vld [vmem:[#allocation2 + $0x1] sm:$0x1]
    %68 = vset.pattern.permute.xlu0 1
    %69 = vperm.xlu0 %68, %v25
    %v70 = vpop.permute.xlu0 %69
    %72 = vset.pattern.permute.xlu0 1
    %73 = vperm.xlu0 %72, %v26
    %v74 = vpop.permute.xlu0 %73
    %76 = vset.pattern.permute.xlu0 1
    %77 = vperm.xlu0 %76, %v27
    %v78 = vpop.permute.xlu0 %77
    %80 = vset.pattern.permute.xlu0 1
    %81 = vperm.xlu0 %80, %v28
    %v82 = vpop.permute.xlu0 %81
    %v84 = vlaneseq
    %v85 = vshrl.u32 %v84, 7
    %v86 = vsub.s32 0, %v85
    %v87 = vrot.slane %v67, %v86
    %v88 = vmul.f32 %v70, %v87
    %v89 = vmul.f32 %v74, %v87
    %v90 = vmul.f32 %v78, %v87
    %v91 = vmul.f32 %v82, %v87
    %v92 = vadd.f32 %v63, %v88
    %v93 = vadd.f32 %v64, %v89
    %v94 = vadd.f32 %v65, %v90
    %v95 = vadd.f32 %v66, %v91
    %v96 = vld [vmem:[#allocation2 + $0x2] sm:$0x1]
    %97 = vset.pattern.permute.xlu0 2
    %98 = vperm.xlu0 %97, %v25
    %v99 = vpop.permute.xlu0 %98
    %101 = vset.pattern.permute.xlu0 2
    %102 = vperm.xlu0 %101, %v26
    %v103 = vpop.permute.xlu0 %102
    %105 = vset.pattern.permute.xlu0 2
    %106 = vperm.xlu0 %105, %v27
    %v107 = vpop.permute.xlu0 %106
    %109 = vset.pattern.permute.xlu0 2
    %110 = vperm.xlu0 %109, %v28
    %v111 = vpop.permute.xlu0 %110
    %v113 = vlaneseq
    %v114 = vshrl.u32 %v113, 7
    %v115 = vsub.s32 0, %v114
    %v116 = vrot.slane %v96, %v115
    %v117 = vmul.f32 %v99, %v116
    %v118 = vmul.f32 %v103, %v116
    %v119 = vmul.f32 %v107, %v116
    %v120 = vmul.f32 %v111, %v116
    %v121 = vadd.f32 %v92, %v117
    %v122 = vadd.f32 %v93, %v118
    %v123 = vadd.f32 %v94, %v119
    %v124 = vadd.f32 %v95, %v120
    %v125 = vld [vmem:[#allocation2 + $0x3] sm:$0x1]
    %126 = vset.pattern.permute.xlu0 3
    %127 = vperm.xlu0 %126, %v25
    %v128 = vpop.permute.xlu0 %127
    %130 = vset.pattern.permute.xlu0 3
    %131 = vperm.xlu0 %130, %v26
    %v132 = vpop.permute.xlu0 %131
    %134 = vset.pattern.permute.xlu0 3
    %135 = vperm.xlu0 %134, %v27
    %v136 = vpop.permute.xlu0 %135
    %138 = vset.pattern.permute.xlu0 3
    %139 = vperm.xlu0 %138, %v28
    %v140 = vpop.permute.xlu0 %139
    %v142 = vlaneseq
    %v143 = vshrl.u32 %v142, 7
    %v144 = vsub.s32 0, %v143
    %v145 = vrot.slane %v125, %v144
    %v146 = vmul.f32 %v128, %v145
    %v147 = vmul.f32 %v132, %v145
    %v148 = vmul.f32 %v136, %v145
    %v149 = vmul.f32 %v140, %v145
    %v150 = vadd.f32 %v121, %v146
    %v151 = vadd.f32 %v122, %v147
    %v152 = vadd.f32 %v123, %v148
    %v153 = vadd.f32 %v124, %v149
    %v154 = vmax.f32 %v150, 0.0
    %v155 = vmax.f32 %v151, 0.0
    %v156 = vmax.f32 %v152, 0.0
    %v157 = vmax.f32 %v153, 0.0
    %v158 = vld [vmem:[#allocation2 + $0x8] sm:$0xff]
    %v159 = vld [vmem:[#allocation2 + $0x10] sm:$0xff]
    %v160 = vld [vmem:[#allocation2 + $0x18] sm:$0xff]
    %v161 = vld [vmem:[#allocation2 + $0x20] sm:$0xff]
    %v162 = vld [vmem:[#allocation2 + $0x28] sm:$0xff]
    %v163 = vld [vmem:[#allocation2 + $0x30] sm:$0xff]
    %v164 = vld [vmem:[#allocation2 + $0x38] sm:$0xff]
    %v165 = vld [vmem:[#allocation2 + $0x40] sm:$0xff]
    %v166 = vld [vmem:[#allocation2 + $0x48] sm:$0xff]
    %v167 = vld [vmem:[#allocation2 + $0x50] sm:$0xff]
    %v168 = vld [vmem:[#allocation2 + $0x58] sm:$0xff]
    %v169 = vld [vmem:[#allocation2 + $0x60] sm:$0xff]
    %v170 = vld [vmem:[#allocation2 + $0x68] sm:$0xff]
    %v171 = vld [vmem:[#allocation2 + $0x70] sm:$0xff]
    %v172 = vld [vmem:[#allocation2 + $0x78] sm:$0xff]
    %v173 = vld [vmem:[#allocation2 + $0x80] sm:$0xff]
    %v174 = vld [vmem:[#allocation2 + $0x88] sm:$0x1]
    %v175 = vlaneseq
    %v176 = vshrl.u32 %v175, 7
    %v177 = vsub.s32 0, %v176
    %v178 = vrot.slane %v174, %v177
    %179 = vmatprep.subr.mxu0 0.0
    %180 = vmatpush1.msra.mxu0 %v158
    %181 = vmatprep.subr.mxu0 0.0
    %182 = vmatpush1.msra.mxu0 %v159
    %183 = vmatprep.subr.mxu0 0.0
    %184 = vmatpush1.msra.mxu0 %v160
    %185 = vmatprep.subr.mxu0 0.0
    %186 = vmatpush1.msra.mxu0 %v161
    %187 = vmatprep.subr.mxu0 0.0
    %188 = vmatpush1.msra.mxu0 %v162
    %189 = vmatprep.subr.mxu0 0.0
    %190 = vmatpush1.msra.mxu0 %v163
    %191 = vmatprep.subr.mxu0 0.0
    %192 = vmatpush1.msra.mxu0 %v164
    %193 = vmatprep.subr.mxu0 0.0
    %194 = vmatpush1.msra.mxu0 %v165
    %195 = vmatprep.subr.mxu0 0.0
    %196 = vmatpush1.msra.mxu0 %v166
    %197 = vmatprep.subr.mxu0 0.0
    %198 = vmatpush1.msra.mxu0 %v167
    %199 = vmatprep.subr.mxu0 0.0
    %200 = vmatpush1.msra.mxu0 %v168
    %201 = vmatprep.subr.mxu0 0.0
    %202 = vmatpush1.msra.mxu0 %v169
    %203 = vmatprep.subr.mxu0 0.0
    %204 = vmatpush1.msra.mxu0 %v170
    %205 = vmatprep.subr.mxu0 0.0
    %206 = vmatpush1.msra.mxu0 %v171
    %207 = vmatprep.subr.mxu0 0.0
    %208 = vmatpush1.msra.mxu0 %v172
    %209 = vmatprep.subr.mxu0 0.0
    %210 = vmatpush1.msra.mxu0 %v173
    %211 = vmatprep.subr.mxu0 0.0
    %212 = vmatpush1.msra.mxu0 0.0
    %213 = vmatprep.subr.mxu0 0.0
    %214 = vmatpush1.msra.mxu0 0.0
    %215 = vmatprep.subr.mxu0 0.0
    %216 = vmatpush1.msra.mxu0 0.0
    %217 = vmatprep.subr.mxu0 0.0
    %218 = vmatpush1.msra.mxu0 0.0
    %219 = vmatprep.subr.mxu0 0.0
    %220 = vmatpush1.msra.mxu0 0.0
    %221 = vmatprep.subr.mxu0 0.0
    %222 = vmatpush1.msra.mxu0 0.0
    %223 = vmatprep.subr.mxu0 0.0
    %224 = vmatpush1.msra.mxu0 0.0
    %225 = vmatprep.subr.mxu0 0.0
    %226 = vmatpush1.msra.mxu0 0.0
    %227 = vmatprep.subr.mxu0 0.0
    %228 = vmatpush1.msra.mxu0 0.0
    %229 = vmatprep.subr.mxu0 0.0
    %230 = vmatpush1.msra.mxu0 0.0
    %231 = vmatprep.subr.mxu0 0.0
    %232 = vmatpush1.msra.mxu0 0.0
    %233 = vmatprep.subr.mxu0 0.0
    %234 = vmatpush1.msra.mxu0 0.0
    %235 = vmatprep.subr.mxu0 0.0
    %236 = vmatpush1.msra.mxu0 0.0
    %237 = vmatprep.subr.mxu0 0.0
    %238 = vmatpush1.msra.mxu0 0.0
    %239 = vmatprep.subr.mxu0 0.0
    %240 = vmatpush1.msra.mxu0 0.0
    %241 = vmatprep.subr.mxu0 0.0
    %242 = vmatpush1.msra.mxu0 0.0
    %243 = vmatprep.mubr.f32.mxu0 0.0
    %244 = vmatmul.mubr.f32.gmra.mrb[0].mxu0 %v154
    %v245 = vpop.f32.mrb[0].mxu0
    %v246 = vadd.f32 %v178, %v245
    %v247 = vpop.f32.mrb[0].mxu0
    %248 = vmatprep.mubr.f32.mxu0 0.0
    %249 = vmatmul.mubr.f32.gmra.mrb[0].mxu0 %v155
    %v250 = vpop.f32.mrb[0].mxu0
    %v251 = vadd.f32 %v178, %v250
    %v252 = vpop.f32.mrb[0].mxu0
    %253 = vmatprep.mubr.f32.mxu0 0.0
    %254 = vmatmul.mubr.f32.gmra.mrb[0].mxu0 %v156
    %v255 = vpop.f32.mrb[0].mxu0
    %v256 = vadd.f32 %v178, %v255
    %v257 = vpop.f32.mrb[0].mxu0
    %258 = vmatprep.mubr.f32.mxu0 0.0
    %259 = vmatmul.mubr.f32.gmra.mrb[0].mxu0 %v157
    %v260 = vpop.f32.mrb[0].mxu0
    %v261 = vadd.f32 %v178, %v260
    %v262 = vpop.f32.mrb[0].mxu0
    %263 = vdwg.mxu0
    %vm264 = vcmask 15360
    %v265 = vsel %vm264, %v246, 0.0
    %v266 = vsel %vm264, %v251, 0.0
    %v267 = vadd.f32 %v265, %v266
    %v268 = vsel %vm264, %v256, 0.0
    %v269 = vadd.f32 %v267, %v268
    %v270 = vsel %vm264, %v261, 0.0
    %v271 = vadd.f32 %v269, %v270
    %272 = vadd.xlane.f32.xlu0 %v271
    %v273 = vpop.xlane.xlu0 %272
    %v274 = vrot.slane %v273, 4
    %v275 = vadd.f32 %v273, %v274
    %v276 = vrot.slane %v275, 2
    %v277 = vadd.f32 %v275, %v276
    %v278 = vrot.slane %v277, 1
    %v279 = vadd.f32 %v277, %v278
    %s280 = vtos %v279
    %v281 = vrcp.pop 64.0
    %s282 = vtos %v281
    %s283 = smul.f32 %s280, %s282
    %285 = vset.pattern.permute.xlu0 2
    %286 = vperm.xlu0 %285, %v246
    %v287 = vpop.permute.xlu0 %286
    %290 = vset.pattern.permute.xlu0 2
    %291 = vperm.xlu0 %290, %v251
    %v292 = vpop.permute.xlu0 %291
    %295 = vset.pattern.permute.xlu0 2
    %296 = vperm.xlu0 %295, %v256
    %v297 = vpop.permute.xlu0 %296
    %300 = vset.pattern.permute.xlu0 2
    %301 = vperm.xlu0 %300, %v261
    %v302 = vpop.permute.xlu0 %301
    %v304 = vadd.f32 %v287, %v246
    %v305 = vadd.f32 %v292, %v251
    %v306 = vadd.f32 %v297, %v256
    %v307 = vadd.f32 %v302, %v261
    %v308 = vstv %s283
    %v309 = vsub.f32 %v304, %v308
    %v310 = vsub.f32 %v305, %v308
    %v311 = vsub.f32 %v306, %v308
    %v312 = vsub.f32 %v307, %v308
    %313 = vst [vmem:[%s2] sm:$0xff] %v309
    %314 = vst [vmem:[%s2 + $0x8] sm:$0xff] %v310
    %315 = vst [vmem:[%s2 + $0x10] sm:$0xff] %v311
    %316 = vst [vmem:[%s2 + $0x18] sm:$0xff] %v312
    // Predicated region
    $region14: #{dueling_net_forward.1} parent=1 // pred_check
      _
    $region15: #{dueling_net_forward.1} parent=1 // pred_check_branch
      %318 = sbr.rel (0) target = $region17
    $region16: #{dueling_net_forward.1} parent=1 // pred_region
      _
    $region17: #{dueling_net_forward.1} parent=1 // pred_fallthru
      _
    // Predicated region
    $region18: #{dueling_net_forward.1} parent=1 // pred_check
      _
    $region19: #{dueling_net_forward.1} parent=1 // pred_check_branch
      %320 = sbr.rel (0) target = $region21
    $region20: #{dueling_net_forward.1} parent=1 // pred_region
      _
    $region21: #{dueling_net_forward.1} parent=1 // pred_fallthru
      _
    %321 = vsyncpa [#allocation3], 1

</llo_original>
